<compile_context>
chip_gen: v7x
topology: tpu7x:2x2x1
jax: 0.10.0
libtpu: 0.0.40
codegen_flags: <defaults>
</compile_context>

<pallas_src>
import functools

import jax
import jax.numpy as jnp
from jax import lax
from jax.experimental import pallas as pl
from jax.experimental.pallas import tpu as pltpu

_SIGMA = 1.0
_RADIUS = 4       # scipy gaussian_filter radius = int(truncate*sigma + 0.5) = 4
_SCALE = 224.0    # the reference module hard-codes t * 224 (independent of col)


def _mse_hm_kernel(xi_ref, yi_ref, valid_ref, h_ref, out_ref, *, col, j_tile):
    """One grid step = j_tile (batch, joint) heatmaps.

    xi_ref / yi_ref / valid_ref : SMEM int32 [N]          (scalar prefetch)
    h_ref                       : VMEM f32 [j_tile, col, col]
    out_ref                     : VMEM f32 [1, col]       (per-block partials)
    """
    g = pl.program_id(0)
    base = g * j_tile

    xs = lax.broadcasted_iota(jnp.int32, (1, col), 1)   # lane index (columns)
    ys = lax.broadcasted_iota(jnp.int32, (col, 1), 0)   # row index

    inv_two_sigma2 = jnp.float32(-1.0 / (2.0 * _SIGMA * _SIGMA))

    def body(jj, acc):
        idx = base + jj
        xi = xi_ref[idx]
        yi = yi_ref[idx]
        valid = valid_ref[idx].astype(jnp.float32)

        h = h_ref[jj].astype(jnp.float32)                 # (col, col)

        # Separable truncated Gaussian factors (peak value 1 at (yi, xi)).
        # TODO(synk): scipy's 'reflect' boundary handling for joints within
        # 4 px of the border is not reproduced (Gaussian is simply clipped).
        dxf = (xs - xi).astype(jnp.float32)               # (1, col)
        dyf = (ys - yi).astype(jnp.float32)               # (col, 1)
        gx = jnp.where(jnp.abs(xs - xi) <= _RADIUS,
                       jnp.exp(dxf * dxf * inv_two_sigma2), jnp.float32(0.0))
        gy = jnp.where(jnp.abs(ys - yi) <= _RADIUS,
                       jnp.exp(dyf * dyf * inv_two_sigma2), jnp.float32(0.0))

        # Per-column partial sums (sublane reductions -> (1, col) vectors):
        #   sum(h^2)        = sum_x cols_sq[x]
        #   sum(h * tt)     = sum_x gx[x] * cols_x[x]
        #   sum(tt^2)       = sum_x gx[x]^2 * sum_y gy[y]^2
        cols_sq = jnp.sum(h * h, axis=0, keepdims=True)   # (1, col)
        cols_x = jnp.sum(h * gy, axis=0, keepdims=True)   # (1, col)
        sgy2 = jnp.sum(gy * gy)                           # scalar

        contrib = cols_sq - 2.0 * gx * cols_x + (gx * gx) * sgy2
        return acc + valid * contrib

    acc = lax.fori_loop(0, j_tile, body, jnp.zeros((1, col), jnp.float32))
    out_ref[...] = acc


def _pick_tile(n, max_tile=16):
    """Largest divisor of n that is <= max_tile (avoids input padding)."""
    for d in range(min(max_tile, n), 0, -1):
        if n % d == 0:
            return d
    return 1


def mean_squared_error_224hm(h, t, v, *, col=224, max_tile=16):
    """h: [B, Nj, col, col] f32, t: [B, Nj, 2] f32 (normalized coords),
    v: [B, Nj, 2] visibility (1.0 = visible)."""
    B, Nj = h.shape[0], h.shape[1]
    N = B * Nj

    # Glue: integer pixel coords (int() truncates toward zero) + validity mask.
    ti = t * _SCALE
    xi = ti[..., 0].astype(jnp.int32).reshape(N)
    yi = ti[..., 1].astype(jnp.int32).reshape(N)
    vis = v[..., 0].astype(jnp.int32).reshape(N)
    in_bounds = (xi >= 0) & (xi <= col - 1) & (yi >= 0) & (yi <= col - 1)
    valid = ((vis == 1) & in_bounds).astype(jnp.int32)
    cnt = jnp.sum(valid).astype(jnp.float32)

    hf = h.reshape(N, col, col)

    j_tile = _pick_tile(N, max_tile)
    n_blocks = N // j_tile

    grid_spec = pltpu.PrefetchScalarGridSpec(
        num_scalar_prefetch=3,
        grid=(n_blocks,),
        in_specs=[
            pl.BlockSpec((j_tile, col, col), lambda g, *_: (g, 0, 0)),
        ],
        out_specs=pl.BlockSpec((1, col), lambda g, *_: (g, 0)),
    )

    partials = pl.pallas_call(
        functools.partial(_mse_hm_kernel, col=col, j_tile=j_tile),
        out_shape=jax.ShapeDtypeStruct((n_blocks, col), jnp.float32),
        grid_spec=grid_spec,
        compiler_params=pltpu.CompilerParams(
            dimension_semantics=("parallel",)),
    )(xi, yi, valid, hf)

    sse = jnp.sum(partials)
    # Reference divides by the raw visible-joint count; guard cnt == 0 (the
    # SSE is also 0 in that case) instead of producing NaN/inf.
    return sse / jnp.maximum(cnt, 1.0)


def _reference_loss(h, t, v, col=224):
    """Pure-JAX reference (same analytic truncated Gaussian) for validation."""
    ti = t * _SCALE
    xi = ti[..., 0].astype(jnp.int32)
    yi = ti[..., 1].astype(jnp.int32)
    vis = v[..., 0].astype(jnp.int32)
    valid = ((vis == 1) & (xi >= 0) & (xi <= col - 1)
             & (yi >= 0) & (yi <= col - 1))
    ys = jnp.arange(col)[:, None]
    xs = jnp.arange(col)[None, :]
    dy = ys[None, None] - yi[:, :, None, None]
    dx = xs[None, None] - xi[:, :, None, None]
    g = jnp.where((jnp.abs(dx) <= _RADIUS) & (jnp.abs(dy) <= _RADIUS),
                  jnp.exp(-0.5 * (dx * dx + dy * dy).astype(jnp.float32)),
                  jnp.float32(0.0))
    tt = jnp.where(valid[:, :, None, None], g, 0.0)
    diff = jnp.where(valid[:, :, None, None], h - tt, 0.0)
    cnt = jnp.maximum(jnp.sum(valid.astype(jnp.float32)), 1.0)
    return jnp.sum(diff * diff) / cnt


if __name__ == "__main__":
    B, Nj, col = 2, 4, 224  # small batch / joint count; native 224x224 maps

    key = jax.random.PRNGKey(0)
    k1, k2 = jax.random.split(key)

    h = jax.random.normal(k1, (B, Nj, col, col), jnp.float32) * 0.1
    # keep joints well inside the image so the analytic Gaussian matches scipy
    t = jax.random.uniform(k2, (B, Nj, 2), jnp.float32, minval=0.1, maxval=0.9)
    v = jnp.ones((B, Nj, 2), jnp.float32)
    v = v.at[0, 1, :].set(0.0)  # one invisible joint (masked & not counted)

    loss = mean_squared_error_224hm(h, t, v, col=col)
    loss = jax.block_until_ready(loss)
    assert loss.shape == () and bool(jnp.isfinite(loss))

    ref = _reference_loss(h, t, v, col=col)
    assert bool(jnp.allclose(loss, ref, rtol=2e-3, atol=1e-4)), (loss, ref)

    print("KERNEL_OK")
</pallas_src>

<mosaic_0001>
module attributes {stable_mosaic.version = 11 : i64} {
  func.func @_mse_hm_kernel(%arg0: i32, %arg1: memref<8xi32, #tpu.memory_space<smem>>, %arg2: memref<8xi32, #tpu.memory_space<smem>>, %arg3: memref<8xi32, #tpu.memory_space<smem>>, %arg4: memref<8x224x224xf32, #tpu.memory_space<vmem>>, %arg5: memref<1x224xf32, #tpu.memory_space<vmem>>) attributes {dimension_semantics = [#tpu.dimension_semantics<parallel>], iteration_bounds = array<i64: 1>, scalar_prefetch = 3 : i64, scratch_operands = 0 : i64, tpu.core_type = #tpu.core_type<tc>, window_params = [{transform_indices = @transform_0, window_bounds = array<i64: 8, 224, 224>}, {transform_indices = @transform_1, window_bounds = array<i64: 1, 224>}]} {
    %c8_i32 = arith.constant 8 : i32
    %0 = arith.muli %arg0, %c8_i32 : i32
    %1 = tpu.iota {dimensions = array<i32: 1>} : vector<1x224xi32>
    %2 = tpu.iota {dimensions = array<i32: 0>} : vector<224x1xi32>
    %cst = arith.constant 0.000000e+00 : f32
    %3 = vector.broadcast %cst : f32 to vector<1x224xf32>
    %cst_0 = arith.constant -5.000000e-01 : f32
    %c0_i32 = arith.constant 0 : i32
    %c8_i32_1 = arith.constant 8 : i32
    %4 = arith.addi %c0_i32, %c8_i32_1 : i32
    %c1_i32 = arith.constant 1 : i32
    %5 = scf.for %arg6 = %c0_i32 to %4 step %c1_i32 iter_args(%arg7 = %3) -> (vector<1x224xf32>)  : i32 {
      %7 = arith.addi %0, %arg6 : i32
      %8 = arith.index_cast %7 : i32 to index
      %9 = memref.load %arg1[%8] : memref<8xi32, #tpu.memory_space<smem>>
      %10 = arith.index_cast %7 : i32 to index
      %11 = memref.load %arg2[%10] : memref<8xi32, #tpu.memory_space<smem>>
      %12 = arith.index_cast %7 : i32 to index
      %13 = memref.load %arg3[%12] : memref<8xi32, #tpu.memory_space<smem>>
      %14 = arith.sitofp %13 : i32 to f32
      %15 = arith.index_cast %arg6 : i32 to index
      %c0_4 = arith.constant 0 : index
      %c0_5 = arith.constant 0 : index
      %16 = vector.load %arg4[%15, %c0_4, %c0_5] : memref<8x224x224xf32, #tpu.memory_space<vmem>>, vector<1x224x224xf32>
      %17 = vector.shape_cast %16 : vector<1x224x224xf32> to vector<224x224xf32>
      %18 = vector.broadcast %9 : i32 to vector<1x224xi32>
      %19 = arith.subi %1, %18 : vector<1x224xi32>
      %20 = arith.sitofp %19 : vector<1x224xi32> to vector<1x224xf32>
      %21 = vector.broadcast %11 : i32 to vector<224x1xi32>
      %22 = arith.subi %2, %21 : vector<224x1xi32>
      %23 = arith.sitofp %22 : vector<224x1xi32> to vector<224x1xf32>
      %24 = vector.broadcast %9 : i32 to vector<1x224xi32>
      %25 = arith.subi %1, %24 : vector<1x224xi32>
      %26 = math.absi %25 : vector<1x224xi32>
      %c4_i32 = arith.constant 4 : i32
      %27 = vector.broadcast %c4_i32 : i32 to vector<1x224xi32>
      %28 = arith.cmpi sle, %26, %27 : vector<1x224xi32>
      %29 = arith.mulf %20, %20 : vector<1x224xf32>
      %30 = vector.broadcast %cst_0 : f32 to vector<1x224xf32>
      %31 = arith.mulf %29, %30 : vector<1x224xf32>
      %32 = math.exp %31 : vector<1x224xf32>
      %cst_6 = arith.constant 0.000000e+00 : f32
      %33 = vector.broadcast %cst_6 : f32 to vector<1x224xf32>
      %34 = arith.select %28, %32, %33 : vector<1x224xi1>, vector<1x224xf32>
      %35 = vector.broadcast %11 : i32 to vector<224x1xi32>
      %36 = arith.subi %2, %35 : vector<224x1xi32>
      %37 = math.absi %36 : vector<224x1xi32>
      %c4_i32_7 = arith.constant 4 : i32
      %38 = vector.broadcast %c4_i32_7 : i32 to vector<224x1xi32>
      %39 = arith.cmpi sle, %37, %38 : vector<224x1xi32>
      %40 = arith.mulf %23, %23 : vector<224x1xf32>
      %41 = vector.broadcast %cst_0 : f32 to vector<224x1xf32>
      %42 = arith.mulf %40, %41 : vector<224x1xf32>
      %43 = math.exp %42 : vector<224x1xf32>
      %cst_8 = arith.constant 0.000000e+00 : f32
      %44 = vector.broadcast %cst_8 : f32 to vector<224x1xf32>
      %45 = arith.select %39, %43, %44 : vector<224x1xi1>, vector<224x1xf32>
      %46 = arith.mulf %17, %17 : vector<224x224xf32>
      %cst_9 = arith.constant dense<0.000000e+00> : vector<224xf32>
      %47 = vector.multi_reduction <add>, %46, %cst_9 [0] : vector<224x224xf32> to vector<224xf32>
      %48 = vector.shape_cast %47 : vector<224xf32> to vector<1x224xf32>
      %49 = vector.broadcast %45 : vector<224x1xf32> to vector<224x224xf32>
      %50 = arith.mulf %17, %49 : vector<224x224xf32>
      %cst_10 = arith.constant dense<0.000000e+00> : vector<224xf32>
      %51 = vector.multi_reduction <add>, %50, %cst_10 [0] : vector<224x224xf32> to vector<224xf32>
      %52 = vector.shape_cast %51 : vector<224xf32> to vector<1x224xf32>
      %53 = arith.mulf %45, %45 : vector<224x1xf32>
      %54 = vector.shape_cast %53 : vector<224x1xf32> to vector<1x224x1xf32>
      %cst_11 = arith.constant dense<0.000000e+00> : vector<1xf32>
      %55 = vector.multi_reduction <add>, %54, %cst_11 [1, 2] : vector<1x224x1xf32> to vector<1xf32>
      %56 = vector.shape_cast %55 : vector<1xf32> to vector<1x1x1xf32>
      %57 = vector.extract %56[0, 0, 0] : f32 from vector<1x1x1xf32>
      %cst_12 = arith.constant 2.000000e+00 : f32
      %58 = vector.broadcast %cst_12 : f32 to vector<1x224xf32>
      %59 = arith.mulf %58, %34 : vector<1x224xf32>
      %60 = arith.mulf %59, %52 : vector<1x224xf32>
      %61 = arith.subf %48, %60 : vector<1x224xf32>
      %62 = arith.mulf %34, %34 : vector<1x224xf32>
      %63 = vector.broadcast %57 : f32 to vector<1x224xf32>
      %64 = arith.mulf %62, %63 : vector<1x224xf32>
      %65 = arith.addf %61, %64 : vector<1x224xf32>
      %66 = vector.broadcast %14 : f32 to vector<1x224xf32>
      %67 = arith.mulf %66, %65 : vector<1x224xf32>
      %68 = arith.addf %arg7, %67 : vector<1x224xf32>
      scf.yield %68 : vector<1x224xf32>
    }
    %c8_i32_2 = arith.constant 8 : i32
    %c0 = arith.constant 0 : index
    %c0_3 = arith.constant 0 : index
    %6 = vector.load %arg5[%c0, %c0_3] : memref<1x224xf32, #tpu.memory_space<vmem>>, vector<1x224xf32>
    tpu.vector_store %arg5[%c0, %c0_3], %5 {strides = array<i32>} : memref<1x224xf32, #tpu.memory_space<vmem>>, vector<1x224xf32>,
    return
  }
  func.func @transform_0(%arg0: i32, %arg1: memref<8xi32, #tpu.memory_space<smem>>, %arg2: memref<8xi32, #tpu.memory_space<smem>>, %arg3: memref<8xi32, #tpu.memory_space<smem>>) -> (i32, i32, i32) {
    %c0_i32 = arith.constant 0 : i32
    %c0_i32_0 = arith.constant 0 : i32
    %c0_i32_1 = arith.constant 0 : i32
    return %arg0, %c0_i32, %c0_i32_0 : i32, i32, i32
  }
  func.func @transform_1(%arg0: i32, %arg1: memref<8xi32, #tpu.memory_space<smem>>, %arg2: memref<8xi32, #tpu.memory_space<smem>>, %arg3: memref<8xi32, #tpu.memory_space<smem>>) -> (i32, i32) {
    %c0_i32 = arith.constant 0 : i32
    %c0_i32_0 = arith.constant 0 : i32
    return %arg0, %c0_i32 : i32, i32
  }
}

</mosaic_0001>

<llo_original>
// kernel: tpu_custom_call.1
$region0: #{tpu_custom_call.1}
  #allocation0 [shape = 'u32[]', space=smem, size = 0x4, offset = 0x4, fixed_abs, tag = 'smem constant byte address 0x4 - core index']
  #allocation1 [shape = 'u32[144,128]{1,0:T(1,128)}', space=vmem, size = 0x12000, scoped, tag = 'internal scratch']
  #allocation2 [shape = 's32[1]{0}', space=sflag, size = 0x4, scoped, tag = 'scoped memory for tpu_custom_call.1']
  #allocation3 [shape = 'u8[512]{0}', space=smem, size = 0x200, scoped, tag = 'prefetched SMEM operand 0']
  #allocation4 [shape = 'u8[512]{0}', space=smem, size = 0x200, scoped, tag = 'prefetched SMEM operand 1']
  #allocation5 [shape = 'u8[512]{0}', space=smem, size = 0x200, scoped, tag = 'prefetched SMEM operand 2']
  %s0 = inlined_call_operand.hbm [shape: s32[8], index: 0, kind: input, shape index: {}]
  %s1 = inlined_call_operand.hbm [shape: s32[8], index: 1, kind: input, shape index: {}]
  %s2 = inlined_call_operand.hbm [shape: s32[8], index: 2, kind: input, shape index: {}]
  %s3 = inlined_call_operand.hbm [shape: f32[8,224,224], index: 3, kind: input, shape index: {}]
  %s4 = inlined_call_operand.hbm [shape: f32[1,224], index: 4, kind: output, shape index: {}]
  %s5 = sld [smem:[#allocation0]]
  $region25: #{tpu_custom_call.1} parent=0
    _
  %s7 = ssub.s32 1, %s5
  %s8 = scalar_select 0, %s7, %s5
  %10 = dma.hbm_to_smem %s0, 16, [#allocation3], [#allocation2]
  %12 = dma.hbm_to_smem %s1, 16, [#allocation4], [#allocation2]
  %14 = dma.hbm_to_smem %s2, 16, [#allocation5], [#allocation2]
  %15 = dma.done [#allocation2], 48
  %16 = sfence
  $region1: #{tpu_custom_call.1} parent=0
    #allocation6 [shape = 'u8[1835008]{0}', space=vmem, size = 0x1c0000, scoped, tag = 'input window, operand 3, single buffered']
    #allocation7 [shape = 's32[1]{0}', space=sflag, size = 0x4, scoped, tag = 'scoped memory for tpu_custom_call.1']
    #allocation8 [shape = 's32[1]{0}', space=sflag, size = 0x4, scoped, tag = 'scoped memory for tpu_custom_call.1']
    #allocation9 [shape = 'u8[1024]{0}', space=vmem, size = 0x400, scoped, tag = 'output window, operand 0, single buffered']
    %17 = vsyncpa [#allocation7], 0
    %18 = vsyncpa [#allocation8], 0
    // Predicated region
    $region2: #{tpu_custom_call.1} parent=1 // pred_check
      _
    $region3: #{tpu_custom_call.1} parent=1 // pred_check_branch
      %20 = sbr.rel (0) target = $region5
    $region4: #{tpu_custom_call.1} parent=1 // pred_region
      %s22 = ssub.s32 57344, 57344
      %23 = vsyncadd [#allocation7], %s22
      %s24 = sshll.u32 [#allocation6], 4
      %s25 = int_to_ptr.vmem [resolvable:$true] %s24
      %30 = dma.hbm_to_vmem [thread:$0]  %s3, 57344, %s25, [#allocation7], 256, 256, 16
    $region5: #{tpu_custom_call.1} parent=1 // pred_fallthru
      _
    // Predicated region
    $region6: #{tpu_custom_call.1} parent=1 // pred_check
      _
    $region7: #{tpu_custom_call.1} parent=1 // pred_check_branch
      %32 = sbr.rel (0) target = $region9
    $region8: #{tpu_custom_call.1} parent=1 // pred_region
      %33 = dma.done [#allocation7], 57344
    $region9: #{tpu_custom_call.1} parent=1 // pred_fallthru
      _
    %s34 = smul.u32 0, 8
    %v35 = vlaneseq
    %v36 = vand.u32 %v35, 127
    %v37 = vadd.s32 %v36, 128
    %v38 = vlaneseq
    %v39 = vshrl.u32 %v38, 7
    %v40 = vadd.s32 %v39, 8
    %v41 = vadd.s32 %v39, 16
    %v42 = vadd.s32 %v39, 24
    %v43 = vadd.s32 %v39, 32
    %v44 = vadd.s32 %v39, 40
    %v45 = vadd.s32 %v39, 48
    %v46 = vadd.s32 %v39, 56
    %v47 = vadd.s32 %v39, 64
    %v48 = vadd.s32 %v39, 72
    %v49 = vadd.s32 %v39, 80
    %v50 = vadd.s32 %v39, 88
    %v51 = vadd.s32 %v39, 96
    %v52 = vadd.s32 %v39, 104
    %v53 = vadd.s32 %v39, 112
    %v54 = vadd.s32 %v39, 120
    %v55 = vadd.s32 %v39, 128
    %v56 = vadd.s32 %v39, 136
    %v57 = vadd.s32 %v39, 144
    %v58 = vadd.s32 %v39, 152
    %v59 = vadd.s32 %v39, 160
    %v60 = vadd.s32 %v39, 168
    %v61 = vadd.s32 %v39, 176
    %v62 = vadd.s32 %v39, 184
    %v63 = vadd.s32 %v39, 192
    %v64 = vadd.s32 %v39, 200
    %v65 = vadd.s32 %v39, 208
    %v66 = vadd.s32 %v39, 216
    loop: start=0, step=1, limit=8
    $region10: #{tpu_custom_call.1} parent=1 // loop_pre_header
      _
    $region11: #{tpu_custom_call.1} parent=1 // loop_header
      %s68 = sphi 0, %s72
      %p69 = scmp.ge.s32.totalorder %s68, 8
      %v73 = vphi 0.0, %v881
      %v74 = vphi 0.0, %v882
    $region12: #{tpu_custom_call.1} parent=1 // loop_header_branch
      %71 = sbr.rel (%p69) target = $region16
    $region13: #{tpu_custom_call.1} parent=1 // loop_body
      %s75 = sadd.s32 %s34, %s68
      %s76 = sld [smem:[#allocation3 + %s75]]
      %s77 = sld [smem:[#allocation4 + %s75]]
      %s78 = sld [smem:[#allocation5 + %s75]]
      %s79 = scvt.s32.f32 %s78
      %s80 = smul.u32 %s68, 56
      %s81 = smul.addr %s80, 8
      %s82 = scalar_lea.vmem [#allocation6], %s81
      %v83 = vld [vmem:[%s82] sm:$0xff]
      %v84 = vld [vmem:[%s82 + $0x8] sm:$0xff]
      %v85 = vld [vmem:[%s82 + $0x10] sm:$0xff]
      %v86 = vld [vmem:[%s82 + $0x18] sm:$0xff]
      %v87 = vld [vmem:[%s82 + $0x20] sm:$0xff]
      %v88 = vld [vmem:[%s82 + $0x28] sm:$0xff]
      %v89 = vld [vmem:[%s82 + $0x30] sm:$0xff]
      %v90 = vld [vmem:[%s82 + $0x38] sm:$0xff]
      %v91 = vld [vmem:[%s82 + $0x40] sm:$0xff]
      %v92 = vld [vmem:[%s82 + $0x48] sm:$0xff]
      %v93 = vld [vmem:[%s82 + $0x50] sm:$0xff]
      %v94 = vld [vmem:[%s82 + $0x58] sm:$0xff]
      %v95 = vld [vmem:[%s82 + $0x60] sm:$0xff]
      %v96 = vld [vmem:[%s82 + $0x68] sm:$0xff]
      %v97 = vld [vmem:[%s82 + $0x70] sm:$0xff]
      %v98 = vld [vmem:[%s82 + $0x78] sm:$0xff]
      %v99 = vld [vmem:[%s82 + $0x80] sm:$0xff]
      %v100 = vld [vmem:[%s82 + $0x88] sm:$0xff]
      %v101 = vld [vmem:[%s82 + $0x90] sm:$0xff]
      %v102 = vld [vmem:[%s82 + $0x98] sm:$0xff]
      %v103 = vld [vmem:[%s82 + $0xa0] sm:$0xff]
      %v104 = vld [vmem:[%s82 + $0xa8] sm:$0xff]
      %v105 = vld [vmem:[%s82 + $0xb0] sm:$0xff]
      %v106 = vld [vmem:[%s82 + $0xb8] sm:$0xff]
      %v107 = vld [vmem:[%s82 + $0xc0] sm:$0xff]
      %v108 = vld [vmem:[%s82 + $0xc8] sm:$0xff]
      %v109 = vld [vmem:[%s82 + $0xd0] sm:$0xff]
      %v110 = vld [vmem:[%s82 + $0xd8] sm:$0xff]
      %v111 = vld [vmem:[%s82 + $0xe0] sm:$0xff]
      %v112 = vld [vmem:[%s82 + $0xe8] sm:$0xff]
      %v113 = vld [vmem:[%s82 + $0xf0] sm:$0xff]
      %v114 = vld [vmem:[%s82 + $0xf8] sm:$0xff]
      %v115 = vld [vmem:[%s82 + $0x100] sm:$0xff]
      %v116 = vld [vmem:[%s82 + $0x108] sm:$0xff]
      %v117 = vld [vmem:[%s82 + $0x110] sm:$0xff]
      %v118 = vld [vmem:[%s82 + $0x118] sm:$0xff]
      %v119 = vld [vmem:[%s82 + $0x120] sm:$0xff]
      %v120 = vld [vmem:[%s82 + $0x128] sm:$0xff]
      %v121 = vld [vmem:[%s82 + $0x130] sm:$0xff]
      %v122 = vld [vmem:[%s82 + $0x138] sm:$0xff]
      %v123 = vld [vmem:[%s82 + $0x140] sm:$0xff]
      %v124 = vld [vmem:[%s82 + $0x148] sm:$0xff]
      %v125 = vld [vmem:[%s82 + $0x150] sm:$0xff]
      %v126 = vld [vmem:[%s82 + $0x158] sm:$0xff]
      %v127 = vld [vmem:[%s82 + $0x160] sm:$0xff]
      %v128 = vld [vmem:[%s82 + $0x168] sm:$0xff]
      %v129 = vld [vmem:[%s82 + $0x170] sm:$0xff]
      %v130 = vld [vmem:[%s82 + $0x178] sm:$0xff]
      %v131 = vld [vmem:[%s82 + $0x180] sm:$0xff]
      %v132 = vld [vmem:[%s82 + $0x188] sm:$0xff]
      %v133 = vld [vmem:[%s82 + $0x190] sm:$0xff]
      %v134 = vld [vmem:[%s82 + $0x198] sm:$0xff]
      %v135 = vld [vmem:[%s82 + $0x1a0] sm:$0xff]
      %v136 = vld [vmem:[%s82 + $0x1a8] sm:$0xff]
      %v137 = vld [vmem:[%s82 + $0x1b0] sm:$0xff]
      %v138 = vld [vmem:[%s82 + $0x1b8] sm:$0xff]
      %v139 = vstv %s76
      %v140 = vsub.s32 %v36, %v139
      %v141 = vsub.s32 %v37, %v139
      %v142 = vcvt.s32.f32 %v140
      %v143 = vcvt.s32.f32 %v141
      %v144 = vstv %s77
      %v145 = vsub.s32 %v39, %v144
      %v146 = vsub.s32 %v40, %v144
      %v147 = vsub.s32 %v41, %v144
      %v148 = vsub.s32 %v42, %v144
      %v149 = vsub.s32 %v43, %v144
      %v150 = vsub.s32 %v44, %v144
      %v151 = vsub.s32 %v45, %v144
      %v152 = vsub.s32 %v46, %v144
      %v153 = vsub.s32 %v47, %v144
      %v154 = vsub.s32 %v48, %v144
      %v155 = vsub.s32 %v49, %v144
      %v156 = vsub.s32 %v50, %v144
      %v157 = vsub.s32 %v51, %v144
      %v158 = vsub.s32 %v52, %v144
      %v159 = vsub.s32 %v53, %v144
      %v160 = vsub.s32 %v54, %v144
      %v161 = vsub.s32 %v55, %v144
      %v162 = vsub.s32 %v56, %v144
      %v163 = vsub.s32 %v57, %v144
      %v164 = vsub.s32 %v58, %v144
      %v165 = vsub.s32 %v59, %v144
      %v166 = vsub.s32 %v60, %v144
      %v167 = vsub.s32 %v61, %v144
      %v168 = vsub.s32 %v62, %v144
      %v169 = vsub.s32 %v63, %v144
      %v170 = vsub.s32 %v64, %v144
      %v171 = vsub.s32 %v65, %v144
      %v172 = vsub.s32 %v66, %v144
      %v173 = vcvt.s32.f32 %v145
      %v174 = vcvt.s32.f32 %v146
      %v175 = vcvt.s32.f32 %v147
      %v176 = vcvt.s32.f32 %v148
      %v177 = vcvt.s32.f32 %v149
      %v178 = vcvt.s32.f32 %v150
      %v179 = vcvt.s32.f32 %v151
      %v180 = vcvt.s32.f32 %v152
      %v181 = vcvt.s32.f32 %v153
      %v182 = vcvt.s32.f32 %v154
      %v183 = vcvt.s32.f32 %v155
      %v184 = vcvt.s32.f32 %v156
      %v185 = vcvt.s32.f32 %v157
      %v186 = vcvt.s32.f32 %v158
      %v187 = vcvt.s32.f32 %v159
      %v188 = vcvt.s32.f32 %v160
      %v189 = vcvt.s32.f32 %v161
      %v190 = vcvt.s32.f32 %v162
      %v191 = vcvt.s32.f32 %v163
      %v192 = vcvt.s32.f32 %v164
      %v193 = vcvt.s32.f32 %v165
      %v194 = vcvt.s32.f32 %v166
      %v195 = vcvt.s32.f32 %v167
      %v196 = vcvt.s32.f32 %v168
      %v197 = vcvt.s32.f32 %v169
      %v198 = vcvt.s32.f32 %v170
      %v199 = vcvt.s32.f32 %v171
      %v200 = vcvt.s32.f32 %v172
      %vm201 = vcmp.lt.s32.totalorder %v140, 0
      %v202 = vsub.s32 0, %v140
      %v203 = vsel %vm201, %v202, %v140
      %vm204 = vcmp.lt.s32.totalorder %v141, 0
      %v205 = vsub.s32 0, %v141
      %v206 = vsel %vm204, %v205, %v141
      %vm207 = vcmp.le.s32.totalorder %v203, 4
      %vm208 = vcmp.le.s32.totalorder %v206, 4
      %v209 = vmul.f32 %v142, %v142
      %v210 = vmul.f32 %v143, %v143
      %v211 = vmul.f32 %v209, -0.5
      %v212 = vmul.f32 %v210, -0.5
      %v213 = vmul.f32 %v211, 1.442695
      %v214 = vpow.pop %v213
      %v215 = vmul.f32 %v212, 1.442695
      %v216 = vpow.pop %v215
      %v217 = vsel %vm207, %v214, 0.0
      %v218 = vsel %vm208, %v216, 0.0
      %vm219 = vcmp.lt.s32.totalorder %v145, 0
      %v220 = vsub.s32 0, %v145
      %v221 = vsel %vm219, %v220, %v145
      %vm222 = vcmp.lt.s32.totalorder %v146, 0
      %v223 = vsub.s32 0, %v146
      %v224 = vsel %vm222, %v223, %v146
      %vm225 = vcmp.lt.s32.totalorder %v147, 0
      %v226 = vsub.s32 0, %v147
      %v227 = vsel %vm225, %v226, %v147
      %vm228 = vcmp.lt.s32.totalorder %v148, 0
      %v229 = vsub.s32 0, %v148
      %v230 = vsel %vm228, %v229, %v148
      %vm231 = vcmp.lt.s32.totalorder %v149, 0
      %v232 = vsub.s32 0, %v149
      %v233 = vsel %vm231, %v232, %v149
      %vm234 = vcmp.lt.s32.totalorder %v150, 0
      %v235 = vsub.s32 0, %v150
      %v236 = vsel %vm234, %v235, %v150
      %vm237 = vcmp.lt.s32.totalorder %v151, 0
      %v238 = vsub.s32 0, %v151
      %v239 = vsel %vm237, %v238, %v151
      %vm240 = vcmp.lt.s32.totalorder %v152, 0
      %v241 = vsub.s32 0, %v152
      %v242 = vsel %vm240, %v241, %v152
      %vm243 = vcmp.lt.s32.totalorder %v153, 0
      %v244 = vsub.s32 0, %v153
      %v245 = vsel %vm243, %v244, %v153
      %vm246 = vcmp.lt.s32.totalorder %v154, 0
      %v247 = vsub.s32 0, %v154
      %v248 = vsel %vm246, %v247, %v154
      %vm249 = vcmp.lt.s32.totalorder %v155, 0
      %v250 = vsub.s32 0, %v155
      %v251 = vsel %vm249, %v250, %v155
      %vm252 = vcmp.lt.s32.totalorder %v156, 0
      %v253 = vsub.s32 0, %v156
      %v254 = vsel %vm252, %v253, %v156
      %vm255 = vcmp.lt.s32.totalorder %v157, 0
      %v256 = vsub.s32 0, %v157
      %v257 = vsel %vm255, %v256, %v157
      %vm258 = vcmp.lt.s32.totalorder %v158, 0
      %v259 = vsub.s32 0, %v158
      %v260 = vsel %vm258, %v259, %v158
      %vm261 = vcmp.lt.s32.totalorder %v159, 0
      %v262 = vsub.s32 0, %v159
      %v263 = vsel %vm261, %v262, %v159
      %vm264 = vcmp.lt.s32.totalorder %v160, 0
      %v265 = vsub.s32 0, %v160
      %v266 = vsel %vm264, %v265, %v160
      %vm267 = vcmp.lt.s32.totalorder %v161, 0
      %v268 = vsub.s32 0, %v161
      %v269 = vsel %vm267, %v268, %v161
      %vm270 = vcmp.lt.s32.totalorder %v162, 0
      %v271 = vsub.s32 0, %v162
      %v272 = vsel %vm270, %v271, %v162
      %vm273 = vcmp.lt.s32.totalorder %v163, 0
      %v274 = vsub.s32 0, %v163
      %v275 = vsel %vm273, %v274, %v163
      %vm276 = vcmp.lt.s32.totalorder %v164, 0
      %v277 = vsub.s32 0, %v164
      %v278 = vsel %vm276, %v277, %v164
      %vm279 = vcmp.lt.s32.totalorder %v165, 0
      %v280 = vsub.s32 0, %v165
      %v281 = vsel %vm279, %v280, %v165
      %vm282 = vcmp.lt.s32.totalorder %v166, 0
      %v283 = vsub.s32 0, %v166
      %v284 = vsel %vm282, %v283, %v166
      %vm285 = vcmp.lt.s32.totalorder %v167, 0
      %v286 = vsub.s32 0, %v167
      %v287 = vsel %vm285, %v286, %v167
      %vm288 = vcmp.lt.s32.totalorder %v168, 0
      %v289 = vsub.s32 0, %v168
      %v290 = vsel %vm288, %v289, %v168
      %vm291 = vcmp.lt.s32.totalorder %v169, 0
      %v292 = vsub.s32 0, %v169
      %v293 = vsel %vm291, %v292, %v169
      %vm294 = vcmp.lt.s32.totalorder %v170, 0
      %v295 = vsub.s32 0, %v170
      %v296 = vsel %vm294, %v295, %v170
      %vm297 = vcmp.lt.s32.totalorder %v171, 0
      %v298 = vsub.s32 0, %v171
      %v299 = vsel %vm297, %v298, %v171
      %vm300 = vcmp.lt.s32.totalorder %v172, 0
      %v301 = vsub.s32 0, %v172
      %v302 = vsel %vm300, %v301, %v172
      %vm303 = vcmp.le.s32.totalorder %v221, 4
      %vm304 = vcmp.le.s32.totalorder %v224, 4
      %vm305 = vcmp.le.s32.totalorder %v227, 4
      %vm306 = vcmp.le.s32.totalorder %v230, 4
      %vm307 = vcmp.le.s32.totalorder %v233, 4
      %vm308 = vcmp.le.s32.totalorder %v236, 4
      %vm309 = vcmp.le.s32.totalorder %v239, 4
      %vm310 = vcmp.le.s32.totalorder %v242, 4
      %vm311 = vcmp.le.s32.totalorder %v245, 4
      %vm312 = vcmp.le.s32.totalorder %v248, 4
      %vm313 = vcmp.le.s32.totalorder %v251, 4
      %vm314 = vcmp.le.s32.totalorder %v254, 4
      %vm315 = vcmp.le.s32.totalorder %v257, 4
      %vm316 = vcmp.le.s32.totalorder %v260, 4
      %vm317 = vcmp.le.s32.totalorder %v263, 4
      %vm318 = vcmp.le.s32.totalorder %v266, 4
      %vm319 = vcmp.le.s32.totalorder %v269, 4
      %vm320 = vcmp.le.s32.totalorder %v272, 4
      %vm321 = vcmp.le.s32.totalorder %v275, 4
      %vm322 = vcmp.le.s32.totalorder %v278, 4
      %vm323 = vcmp.le.s32.totalorder %v281, 4
      %vm324 = vcmp.le.s32.totalorder %v284, 4
      %vm325 = vcmp.le.s32.totalorder %v287, 4
      %vm326 = vcmp.le.s32.totalorder %v290, 4
      %vm327 = vcmp.le.s32.totalorder %v293, 4
      %vm328 = vcmp.le.s32.totalorder %v296, 4
      %vm329 = vcmp.le.s32.totalorder %v299, 4
      %vm330 = vcmp.le.s32.totalorder %v302, 4
      %v331 = vmul.f32 %v173, %v173
      %v332 = vmul.f32 %v174, %v174
      %v333 = vmul.f32 %v175, %v175
      %v334 = vmul.f32 %v176, %v176
      %v335 = vmul.f32 %v177, %v177
      %v336 = vmul.f32 %v178, %v178
      %v337 = vmul.f32 %v179, %v179
      %v338 = vmul.f32 %v180, %v180
      %v339 = vmul.f32 %v181, %v181
      %v340 = vmul.f32 %v182, %v182
      %v341 = vmul.f32 %v183, %v183
      %v342 = vmul.f32 %v184, %v184
      %v343 = vmul.f32 %v185, %v185
      %v344 = vmul.f32 %v186, %v186
      %v345 = vmul.f32 %v187, %v187
      %v346 = vmul.f32 %v188, %v188
      %v347 = vmul.f32 %v189, %v189
      %v348 = vmul.f32 %v190, %v190
      %v349 = vmul.f32 %v191, %v191
      %v350 = vmul.f32 %v192, %v192
      %v351 = vmul.f32 %v193, %v193
      %v352 = vmul.f32 %v194, %v194
      %v353 = vmul.f32 %v195, %v195
      %v354 = vmul.f32 %v196, %v196
      %v355 = vmul.f32 %v197, %v197
      %v356 = vmul.f32 %v198, %v198
      %v357 = vmul.f32 %v199, %v199
      %v358 = vmul.f32 %v200, %v200
      %v359 = vmul.f32 %v331, -0.5
      %v360 = vmul.f32 %v332, -0.5
      %v361 = vmul.f32 %v333, -0.5
      %v362 = vmul.f32 %v334, -0.5
      %v363 = vmul.f32 %v335, -0.5
      %v364 = vmul.f32 %v336, -0.5
      %v365 = vmul.f32 %v337, -0.5
      %v366 = vmul.f32 %v338, -0.5
      %v367 = vmul.f32 %v339, -0.5
      %v368 = vmul.f32 %v340, -0.5
      %v369 = vmul.f32 %v341, -0.5
      %v370 = vmul.f32 %v342, -0.5
      %v371 = vmul.f32 %v343, -0.5
      %v372 = vmul.f32 %v344, -0.5
      %v373 = vmul.f32 %v345, -0.5
      %v374 = vmul.f32 %v346, -0.5
      %v375 = vmul.f32 %v347, -0.5
      %v376 = vmul.f32 %v348, -0.5
      %v377 = vmul.f32 %v349, -0.5
      %v378 = vmul.f32 %v350, -0.5
      %v379 = vmul.f32 %v351, -0.5
      %v380 = vmul.f32 %v352, -0.5
      %v381 = vmul.f32 %v353, -0.5
      %v382 = vmul.f32 %v354, -0.5
      %v383 = vmul.f32 %v355, -0.5
      %v384 = vmul.f32 %v356, -0.5
      %v385 = vmul.f32 %v357, -0.5
      %v386 = vmul.f32 %v358, -0.5
      %v387 = vmul.f32 %v359, 1.442695
      %v388 = vpow.pop %v387
      %v389 = vmul.f32 %v360, 1.442695
      %v390 = vpow.pop %v389
      %v391 = vmul.f32 %v361, 1.442695
      %v392 = vpow.pop %v391
      %v393 = vmul.f32 %v362, 1.442695
      %v394 = vpow.pop %v393
      %v395 = vmul.f32 %v363, 1.442695
      %v396 = vpow.pop %v395
      %v397 = vmul.f32 %v364, 1.442695
      %v398 = vpow.pop %v397
      %v399 = vmul.f32 %v365, 1.442695
      %v400 = vpow.pop %v399
      %v401 = vmul.f32 %v366, 1.442695
      %v402 = vpow.pop %v401
      %v403 = vmul.f32 %v367, 1.442695
      %v404 = vpow.pop %v403
      %v405 = vmul.f32 %v368, 1.442695
      %v406 = vpow.pop %v405
      %v407 = vmul.f32 %v369, 1.442695
      %v408 = vpow.pop %v407
      %v409 = vmul.f32 %v370, 1.442695
      %v410 = vpow.pop %v409
      %v411 = vmul.f32 %v371, 1.442695
      %v412 = vpow.pop %v411
      %v413 = vmul.f32 %v372, 1.442695
      %v414 = vpow.pop %v413
      %v415 = vmul.f32 %v373, 1.442695
      %v416 = vpow.pop %v415
      %v417 = vmul.f32 %v374, 1.442695
      %v418 = vpow.pop %v417
      %v419 = vmul.f32 %v375, 1.442695
      %v420 = vpow.pop %v419
      %v421 = vmul.f32 %v376, 1.442695
      %v422 = vpow.pop %v421
      %v423 = vmul.f32 %v377, 1.442695
      %v424 = vpow.pop %v423
      %v425 = vmul.f32 %v378, 1.442695
      %v426 = vpow.pop %v425
      %v427 = vmul.f32 %v379, 1.442695
      %v428 = vpow.pop %v427
      %v429 = vmul.f32 %v380, 1.442695
      %v430 = vpow.pop %v429
      %v431 = vmul.f32 %v381, 1.442695
      %v432 = vpow.pop %v431
      %v433 = vmul.f32 %v382, 1.442695
      %v434 = vpow.pop %v433
      %v435 = vmul.f32 %v383, 1.442695
      %v436 = vpow.pop %v435
      %v437 = vmul.f32 %v384, 1.442695
      %v438 = vpow.pop %v437
      %v439 = vmul.f32 %v385, 1.442695
      %v440 = vpow.pop %v439
      %v441 = vmul.f32 %v386, 1.442695
      %v442 = vpow.pop %v441
      %v443 = vsel %vm303, %v388, 0.0
      %v444 = vsel %vm304, %v390, 0.0
      %v445 = vsel %vm305, %v392, 0.0
      %v446 = vsel %vm306, %v394, 0.0
      %v447 = vsel %vm307, %v396, 0.0
      %v448 = vsel %vm308, %v398, 0.0
      %v449 = vsel %vm309, %v400, 0.0
      %v450 = vsel %vm310, %v402, 0.0
      %v451 = vsel %vm311, %v404, 0.0
      %v452 = vsel %vm312, %v406, 0.0
      %v453 = vsel %vm313, %v408, 0.0
      %v454 = vsel %vm314, %v410, 0.0
      %v455 = vsel %vm315, %v412, 0.0
      %v456 = vsel %vm316, %v414, 0.0
      %v457 = vsel %vm317, %v416, 0.0
      %v458 = vsel %vm318, %v418, 0.0
      %v459 = vsel %vm319, %v420, 0.0
      %v460 = vsel %vm320, %v422, 0.0
      %v461 = vsel %vm321, %v424, 0.0
      %v462 = vsel %vm322, %v426, 0.0
      %v463 = vsel %vm323, %v428, 0.0
      %v464 = vsel %vm324, %v430, 0.0
      %v465 = vsel %vm325, %v432, 0.0
      %v466 = vsel %vm326, %v434, 0.0
      %v467 = vsel %vm327, %v436, 0.0
      %v468 = vsel %vm328, %v438, 0.0
      %v469 = vsel %vm329, %v440, 0.0
      %v470 = vsel %vm330, %v442, 0.0
      %v471 = vmul.f32 %v83, %v83
      %v472 = vmul.f32 %v84, %v84
      %v473 = vmul.f32 %v85, %v85
      %v474 = vmul.f32 %v86, %v86
      %v475 = vmul.f32 %v87, %v87
      %v476 = vmul.f32 %v88, %v88
      %v477 = vmul.f32 %v89, %v89
      %v478 = vmul.f32 %v90, %v90
      %v479 = vmul.f32 %v91, %v91
      %v480 = vmul.f32 %v92, %v92
      %v481 = vmul.f32 %v93, %v93
      %v482 = vmul.f32 %v94, %v94
      %v483 = vmul.f32 %v95, %v95
      %v484 = vmul.f32 %v96, %v96
      %v485 = vmul.f32 %v97, %v97
      %v486 = vmul.f32 %v98, %v98
      %v487 = vmul.f32 %v99, %v99
      %v488 = vmul.f32 %v100, %v100
      %v489 = vmul.f32 %v101, %v101
      %v490 = vmul.f32 %v102, %v102
      %v491 = vmul.f32 %v103, %v103
      %v492 = vmul.f32 %v104, %v104
      %v493 = vmul.f32 %v105, %v105
      %v494 = vmul.f32 %v106, %v106
      %v495 = vmul.f32 %v107, %v107
      %v496 = vmul.f32 %v108, %v108
      %v497 = vmul.f32 %v109, %v109
      %v498 = vmul.f32 %v110, %v110
      %v499 = vmul.f32 %v111, %v111
      %v500 = vmul.f32 %v112, %v112
      %v501 = vmul.f32 %v113, %v113
      %v502 = vmul.f32 %v114, %v114
      %v503 = vmul.f32 %v115, %v115
      %v504 = vmul.f32 %v116, %v116
      %v505 = vmul.f32 %v117, %v117
      %v506 = vmul.f32 %v118, %v118
      %v507 = vmul.f32 %v119, %v119
      %v508 = vmul.f32 %v120, %v120
      %v509 = vmul.f32 %v121, %v121
      %v510 = vmul.f32 %v122, %v122
      %v511 = vmul.f32 %v123, %v123
      %v512 = vmul.f32 %v124, %v124
      %v513 = vmul.f32 %v125, %v125
      %v514 = vmul.f32 %v126, %v126
      %v515 = vmul.f32 %v127, %v127
      %v516 = vmul.f32 %v128, %v128
      %v517 = vmul.f32 %v129, %v129
      %v518 = vmul.f32 %v130, %v130
      %v519 = vmul.f32 %v131, %v131
      %v520 = vmul.f32 %v132, %v132
      %v521 = vmul.f32 %v133, %v133
      %v522 = vmul.f32 %v134, %v134
      %v523 = vmul.f32 %v135, %v135
      %v524 = vmul.f32 %v136, %v136
      %v525 = vmul.f32 %v137, %v137
      %v526 = vmul.f32 %v138, %v138
      %v527 = vadd.f32 %v471, %v473
      %v528 = vadd.f32 %v527, %v475
      %v529 = vadd.f32 %v528, %v477
      %v530 = vadd.f32 %v529, %v479
      %v531 = vadd.f32 %v530, %v481
      %v532 = vadd.f32 %v531, %v483
      %v533 = vadd.f32 %v532, %v485
      %v534 = vadd.f32 %v533, %v487
      %v535 = vadd.f32 %v534, %v489
      %v536 = vadd.f32 %v535, %v491
      %v537 = vadd.f32 %v536, %v493
      %v538 = vadd.f32 %v537, %v495
      %v539 = vadd.f32 %v538, %v497
      %v540 = vadd.f32 %v539, %v499
      %v541 = vadd.f32 %v540, %v501
      %v542 = vadd.f32 %v541, %v503
      %v543 = vadd.f32 %v542, %v505
      %v544 = vadd.f32 %v543, %v507
      %v545 = vadd.f32 %v544, %v509
      %v546 = vadd.f32 %v545, %v511
      %v547 = vadd.f32 %v546, %v513
      %v548 = vadd.f32 %v547, %v515
      %v549 = vadd.f32 %v548, %v517
      %v550 = vadd.f32 %v549, %v519
      %v551 = vadd.f32 %v550, %v521
      %v552 = vadd.f32 %v551, %v523
      %v553 = vadd.f32 %v552, %v525
      %v554 = vrot.slane %v553, 4
      %v555 = vadd.f32 %v553, %v554
      %v556 = vrot.slane %v555, 2
      %v557 = vadd.f32 %v555, %v556
      %v558 = vrot.slane %v557, 1
      %v559 = vadd.f32 %v557, %v558
      %vm560 = vcmask 785408
      %v561 = vsel %vm560, %v472, 0.0
      %v562 = vsel %vm560, %v474, 0.0
      %v563 = vadd.f32 %v561, %v562
      %v564 = vsel %vm560, %v476, 0.0
      %v565 = vadd.f32 %v563, %v564
      %v566 = vsel %vm560, %v478, 0.0
      %v567 = vadd.f32 %v565, %v566
      %v568 = vsel %vm560, %v480, 0.0
      %v569 = vadd.f32 %v567, %v568
      %v570 = vsel %vm560, %v482, 0.0
      %v571 = vadd.f32 %v569, %v570
      %v572 = vsel %vm560, %v484, 0.0
      %v573 = vadd.f32 %v571, %v572
      %v574 = vsel %vm560, %v486, 0.0
      %v575 = vadd.f32 %v573, %v574
      %v576 = vsel %vm560, %v488, 0.0
      %v577 = vadd.f32 %v575, %v576
      %v578 = vsel %vm560, %v490, 0.0
      %v579 = vadd.f32 %v577, %v578
      %v580 = vsel %vm560, %v492, 0.0
      %v581 = vadd.f32 %v579, %v580
      %v582 = vsel %vm560, %v494, 0.0
      %v583 = vadd.f32 %v581, %v582
      %v584 = vsel %vm560, %v496, 0.0
      %v585 = vadd.f32 %v583, %v584
      %v586 = vsel %vm560, %v498, 0.0
      %v587 = vadd.f32 %v585, %v586
      %v588 = vsel %vm560, %v500, 0.0
      %v589 = vadd.f32 %v587, %v588
      %v590 = vsel %vm560, %v502, 0.0
      %v591 = vadd.f32 %v589, %v590
      %v592 = vsel %vm560, %v504, 0.0
      %v593 = vadd.f32 %v591, %v592
      %v594 = vsel %vm560, %v506, 0.0
      %v595 = vadd.f32 %v593, %v594
      %v596 = vsel %vm560, %v508, 0.0
      %v597 = vadd.f32 %v595, %v596
      %v598 = vsel %vm560, %v510, 0.0
      %v599 = vadd.f32 %v597, %v598
      %v600 = vsel %vm560, %v512, 0.0
      %v601 = vadd.f32 %v599, %v600
      %v602 = vsel %vm560, %v514, 0.0
      %v603 = vadd.f32 %v601, %v602
      %v604 = vsel %vm560, %v516, 0.0
      %v605 = vadd.f32 %v603, %v604
      %v606 = vsel %vm560, %v518, 0.0
      %v607 = vadd.f32 %v605, %v606
      %v608 = vsel %vm560, %v520, 0.0
      %v609 = vadd.f32 %v607, %v608
      %v610 = vsel %vm560, %v522, 0.0
      %v611 = vadd.f32 %v609, %v610
      %v612 = vsel %vm560, %v524, 0.0
      %v613 = vadd.f32 %v611, %v612
      %v614 = vsel %vm560, %v526, 0.0
      %v615 = vadd.f32 %v613, %v614
      %v616 = vrot.slane %v615, 4
      %v617 = vadd.f32 %v615, %v616
      %v618 = vrot.slane %v617, 2
      %v619 = vadd.f32 %v617, %v618
      %v620 = vrot.slane %v619, 1
      %v621 = vadd.f32 %v619, %v620
      %v622 = vmul.f32 %v83, %v443
      %v623 = vmul.f32 %v84, %v443
      %v624 = vmul.f32 %v85, %v444
      %v625 = vmul.f32 %v86, %v444
      %v626 = vmul.f32 %v87, %v445
      %v627 = vmul.f32 %v88, %v445
      %v628 = vmul.f32 %v89, %v446
      %v629 = vmul.f32 %v90, %v446
      %v630 = vmul.f32 %v91, %v447
      %v631 = vmul.f32 %v92, %v447
      %v632 = vmul.f32 %v93, %v448
      %v633 = vmul.f32 %v94, %v448
      %v634 = vmul.f32 %v95, %v449
      %v635 = vmul.f32 %v96, %v449
      %v636 = vmul.f32 %v97, %v450
      %v637 = vmul.f32 %v98, %v450
      %v638 = vmul.f32 %v99, %v451
      %v639 = vmul.f32 %v100, %v451
      %v640 = vmul.f32 %v101, %v452
      %v641 = vmul.f32 %v102, %v452
      %v642 = vmul.f32 %v103, %v453
      %v643 = vmul.f32 %v104, %v453
      %v644 = vmul.f32 %v105, %v454
      %v645 = vmul.f32 %v106, %v454
      %v646 = vmul.f32 %v107, %v455
      %v647 = vmul.f32 %v108, %v455
      %v648 = vmul.f32 %v109, %v456
      %v649 = vmul.f32 %v110, %v456
      %v650 = vmul.f32 %v111, %v457
      %v651 = vmul.f32 %v112, %v457
      %v652 = vmul.f32 %v113, %v458
      %v653 = vmul.f32 %v114, %v458
      %v654 = vmul.f32 %v115, %v459
      %v655 = vmul.f32 %v116, %v459
      %v656 = vmul.f32 %v117, %v460
      %v657 = vmul.f32 %v118, %v460
      %v658 = vmul.f32 %v119, %v461
      %v659 = vmul.f32 %v120, %v461
      %v660 = vmul.f32 %v121, %v462
      %v661 = vmul.f32 %v122, %v462
      %v662 = vmul.f32 %v123, %v463
      %v663 = vmul.f32 %v124, %v463
      %v664 = vmul.f32 %v125, %v464
      %v665 = vmul.f32 %v126, %v464
      %v666 = vmul.f32 %v127, %v465
      %v667 = vmul.f32 %v128, %v465
      %v668 = vmul.f32 %v129, %v466
      %v669 = vmul.f32 %v130, %v466
      %v670 = vmul.f32 %v131, %v467
      %v671 = vmul.f32 %v132, %v467
      %v672 = vmul.f32 %v133, %v468
      %v673 = vmul.f32 %v134, %v468
      %v674 = vmul.f32 %v135, %v469
      %v675 = vmul.f32 %v136, %v469
      %v676 = vmul.f32 %v137, %v470
      %v677 = vmul.f32 %v138, %v470
      %v678 = vadd.f32 %v622, %v624
      %v679 = vadd.f32 %v678, %v626
      %v680 = vadd.f32 %v679, %v628
      %v681 = vadd.f32 %v680, %v630
      %v682 = vadd.f32 %v681, %v632
      %v683 = vadd.f32 %v682, %v634
      %v684 = vadd.f32 %v683, %v636
      %v685 = vadd.f32 %v684, %v638
      %v686 = vadd.f32 %v685, %v640
      %v687 = vadd.f32 %v686, %v642
      %v688 = vadd.f32 %v687, %v644
      %v689 = vadd.f32 %v688, %v646
      %v690 = vadd.f32 %v689, %v648
      %v691 = vadd.f32 %v690, %v650
      %v692 = vadd.f32 %v691, %v652
      %v693 = vadd.f32 %v692, %v654
      %v694 = vadd.f32 %v693, %v656
      %v695 = vadd.f32 %v694, %v658
      %v696 = vadd.f32 %v695, %v660
      %v697 = vadd.f32 %v696, %v662
      %v698 = vadd.f32 %v697, %v664
      %v699 = vadd.f32 %v698, %v666
      %v700 = vadd.f32 %v699, %v668
      %v701 = vadd.f32 %v700, %v670
      %v702 = vadd.f32 %v701, %v672
      %v703 = vadd.f32 %v702, %v674
      %v704 = vadd.f32 %v703, %v676
      %v705 = vrot.slane %v704, 4
      %v706 = vadd.f32 %v704, %v705
      %v707 = vrot.slane %v706, 2
      %v708 = vadd.f32 %v706, %v707
      %v709 = vrot.slane %v708, 1
      %v710 = vadd.f32 %v708, %v709
      %v711 = vsel %vm560, %v623, 0.0
      %v712 = vsel %vm560, %v625, 0.0
      %v713 = vadd.f32 %v711, %v712
      %v714 = vsel %vm560, %v627, 0.0
      %v715 = vadd.f32 %v713, %v714
      %v716 = vsel %vm560, %v629, 0.0
      %v717 = vadd.f32 %v715, %v716
      %v718 = vsel %vm560, %v631, 0.0
      %v719 = vadd.f32 %v717, %v718
      %v720 = vsel %vm560, %v633, 0.0
      %v721 = vadd.f32 %v719, %v720
      %v722 = vsel %vm560, %v635, 0.0
      %v723 = vadd.f32 %v721, %v722
      %v724 = vsel %vm560, %v637, 0.0
      %v725 = vadd.f32 %v723, %v724
      %v726 = vsel %vm560, %v639, 0.0
      %v727 = vadd.f32 %v725, %v726
      %v728 = vsel %vm560, %v641, 0.0
      %v729 = vadd.f32 %v727, %v728
      %v730 = vsel %vm560, %v643, 0.0
      %v731 = vadd.f32 %v729, %v730
      %v732 = vsel %vm560, %v645, 0.0
      %v733 = vadd.f32 %v731, %v732
      %v734 = vsel %vm560, %v647, 0.0
      %v735 = vadd.f32 %v733, %v734
      %v736 = vsel %vm560, %v649, 0.0
      %v737 = vadd.f32 %v735, %v736
      %v738 = vsel %vm560, %v651, 0.0
      %v739 = vadd.f32 %v737, %v738
      %v740 = vsel %vm560, %v653, 0.0
      %v741 = vadd.f32 %v739, %v740
      %v742 = vsel %vm560, %v655, 0.0
      %v743 = vadd.f32 %v741, %v742
      %v744 = vsel %vm560, %v657, 0.0
      %v745 = vadd.f32 %v743, %v744
      %v746 = vsel %vm560, %v659, 0.0
      %v747 = vadd.f32 %v745, %v746
      %v748 = vsel %vm560, %v661, 0.0
      %v749 = vadd.f32 %v747, %v748
      %v750 = vsel %vm560, %v663, 0.0
      %v751 = vadd.f32 %v749, %v750
      %v752 = vsel %vm560, %v665, 0.0
      %v753 = vadd.f32 %v751, %v752
      %v754 = vsel %vm560, %v667, 0.0
      %v755 = vadd.f32 %v753, %v754
      %v756 = vsel %vm560, %v669, 0.0
      %v757 = vadd.f32 %v755, %v756
      %v758 = vsel %vm560, %v671, 0.0
      %v759 = vadd.f32 %v757, %v758
      %v760 = vsel %vm560, %v673, 0.0
      %v761 = vadd.f32 %v759, %v760
      %v762 = vsel %vm560, %v675, 0.0
      %v763 = vadd.f32 %v761, %v762
      %v764 = vsel %vm560, %v677, 0.0
      %v765 = vadd.f32 %v763, %v764
      %v766 = vrot.slane %v765, 4
      %v767 = vadd.f32 %v765, %v766
      %v768 = vrot.slane %v767, 2
      %v769 = vadd.f32 %v767, %v768
      %v770 = vrot.slane %v769, 1
      %v771 = vadd.f32 %v769, %v770
      %v772 = vmul.f32 %v443, %v443
      %v773 = vmul.f32 %v444, %v444
      %v774 = vmul.f32 %v445, %v445
      %v775 = vmul.f32 %v446, %v446
      %v776 = vmul.f32 %v447, %v447
      %v777 = vmul.f32 %v448, %v448
      %v778 = vmul.f32 %v449, %v449
      %v779 = vmul.f32 %v450, %v450
      %v780 = vmul.f32 %v451, %v451
      %v781 = vmul.f32 %v452, %v452
      %v782 = vmul.f32 %v453, %v453
      %v783 = vmul.f32 %v454, %v454
      %v784 = vmul.f32 %v455, %v455
      %v785 = vmul.f32 %v456, %v456
      %v786 = vmul.f32 %v457, %v457
      %v787 = vmul.f32 %v458, %v458
      %v788 = vmul.f32 %v459, %v459
      %v789 = vmul.f32 %v460, %v460
      %v790 = vmul.f32 %v461, %v461
      %v791 = vmul.f32 %v462, %v462
      %v792 = vmul.f32 %v463, %v463
      %v793 = vmul.f32 %v464, %v464
      %v794 = vmul.f32 %v465, %v465
      %v795 = vmul.f32 %v466, %v466
      %v796 = vmul.f32 %v467, %v467
      %v797 = vmul.f32 %v468, %v468
      %v798 = vmul.f32 %v469, %v469
      %v799 = vmul.f32 %v470, %v470
      %vm800 = vcmask 7168
      %v801 = vsel %vm800, %v772, 0.0
      %v802 = vsel %vm800, %v773, 0.0
      %v803 = vadd.f32 %v801, %v802
      %v804 = vsel %vm800, %v774, 0.0
      %v805 = vadd.f32 %v803, %v804
      %v806 = vsel %vm800, %v775, 0.0
      %v807 = vadd.f32 %v805, %v806
      %v808 = vsel %vm800, %v776, 0.0
      %v809 = vadd.f32 %v807, %v808
      %v810 = vsel %vm800, %v777, 0.0
      %v811 = vadd.f32 %v809, %v810
      %v812 = vsel %vm800, %v778, 0.0
      %v813 = vadd.f32 %v811, %v812
      %v814 = vsel %vm800, %v779, 0.0
      %v815 = vadd.f32 %v813, %v814
      %v816 = vsel %vm800, %v780, 0.0
      %v817 = vadd.f32 %v815, %v816
      %v818 = vsel %vm800, %v781, 0.0
      %v819 = vadd.f32 %v817, %v818
      %v820 = vsel %vm800, %v782, 0.0
      %v821 = vadd.f32 %v819, %v820
      %v822 = vsel %vm800, %v783, 0.0
      %v823 = vadd.f32 %v821, %v822
      %v824 = vsel %vm800, %v784, 0.0
      %v825 = vadd.f32 %v823, %v824
      %v826 = vsel %vm800, %v785, 0.0
      %v827 = vadd.f32 %v825, %v826
      %v828 = vsel %vm800, %v786, 0.0
      %v829 = vadd.f32 %v827, %v828
      %v830 = vsel %vm800, %v787, 0.0
      %v831 = vadd.f32 %v829, %v830
      %v832 = vsel %vm800, %v788, 0.0
      %v833 = vadd.f32 %v831, %v832
      %v834 = vsel %vm800, %v789, 0.0
      %v835 = vadd.f32 %v833, %v834
      %v836 = vsel %vm800, %v790, 0.0
      %v837 = vadd.f32 %v835, %v836
      %v838 = vsel %vm800, %v791, 0.0
      %v839 = vadd.f32 %v837, %v838
      %v840 = vsel %vm800, %v792, 0.0
      %v841 = vadd.f32 %v839, %v840
      %v842 = vsel %vm800, %v793, 0.0
      %v843 = vadd.f32 %v841, %v842
      %v844 = vsel %vm800, %v794, 0.0
      %v845 = vadd.f32 %v843, %v844
      %v846 = vsel %vm800, %v795, 0.0
      %v847 = vadd.f32 %v845, %v846
      %v848 = vsel %vm800, %v796, 0.0
      %v849 = vadd.f32 %v847, %v848
      %v850 = vsel %vm800, %v797, 0.0
      %v851 = vadd.f32 %v849, %v850
      %v852 = vsel %vm800, %v798, 0.0
      %v853 = vadd.f32 %v851, %v852
      %v854 = vsel %vm800, %v799, 0.0
      %v855 = vadd.f32 %v853, %v854
      %856 = vadd.xlane.f32.xlu0 %v855
      %v857 = vpop.xlane.xlu0 %856
      %v858 = vrot.slane %v857, 4
      %v859 = vadd.f32 %v857, %v858
      %v860 = vrot.slane %v859, 2
      %v861 = vadd.f32 %v859, %v860
      %v862 = vrot.slane %v861, 1
      %v863 = vadd.f32 %v861, %v862
      %s864 = vtos %v863
      %v865 = vmul.f32 %v217, 2.0
      %v866 = vmul.f32 %v218, 2.0
      %v867 = vmul.f32 %v865, %v710
      %v868 = vmul.f32 %v866, %v771
      %v869 = vsub.f32 %v559, %v867
      %v870 = vsub.f32 %v621, %v868
      %v871 = vmul.f32 %v217, %v217
      %v872 = vmul.f32 %v218, %v218
      %v873 = vstv %s864
      %v874 = vmul.f32 %v871, %v873
      %v875 = vmul.f32 %v872, %v873
      %v876 = vadd.f32 %v869, %v874
      %v877 = vadd.f32 %v870, %v875
      %v878 = vstv %s79
      %v879 = vmul.f32 %v878, %v876
      %v880 = vmul.f32 %v878, %v877
      %v881 = vadd.f32 %v73, %v879
      %v882 = vadd.f32 %v74, %v880
    $region14: #{tpu_custom_call.1} parent=1 // loop_footer
      %s72 = sadd.s32 1, %s68
    $region15: #{tpu_custom_call.1} parent=1 // loop_footer_branch
      %67 = sbr.rel target = $region11
    $region16: #{tpu_custom_call.1} parent=1 // loop_exit
      _
    %v885 = vcombine.low %v73, %v74
    %v887 = vunpack.c.l.s4 1966171168
    %v888 = vunpack.c.0.s8 %v887
    %v889 = vlaneseq
    %v890 = vshrl.u32 %v889, 7
    %v891 = vsub.s32 %v888, %v890
    %v892 = vrot.slane %v885, %v891
    %v894 = vunpack.c.l.s4 1966171168
    %v895 = vunpack.c.0.s8 %v894
    %v896 = vlaneseq
    %v897 = vshrl.u32 %v896, 7
    %v898 = vsub.s32 %v895, %v897
    %v899 = vrot.slane %v892, %v898
    %v901 = vlaneseq
    %vm902 = vcmp.ge.s32.totalorder %v901, 0
    %vm903 = vcmp.lt.s32.totalorder %v901, 224
    %vm904 = vmand %vm902, %vm903
    %905 = vst.msk [vmem:[#allocation9] sm:$0x3] %vm904, %v899
    // Predicated region
    $region17: #{tpu_custom_call.1} parent=1 // pred_check
      _
    $region18: #{tpu_custom_call.1} parent=1 // pred_check_branch
      %907 = sbr.rel (0) target = $region20
    $region19: #{tpu_custom_call.1} parent=1 // pred_region
      %s909 = ssub.s32 32, 32
      %910 = vsyncadd [#allocation8], %s909
      %s912 = sshll.u32 [#allocation9], 4
      %s913 = int_to_ptr.vmem [resolvable:$true] %s912
      %915 = dma.vmem_to_hbm [thread:$0]  %s913, 32, %s4, [#allocation8]
    $region20: #{tpu_custom_call.1} parent=1 // pred_fallthru
      _
    // Predicated region
    $region21: #{tpu_custom_call.1} parent=1 // pred_check
      _
    $region22: #{tpu_custom_call.1} parent=1 // pred_check_branch
      %917 = sbr.rel (0) target = $region24
    $region23: #{tpu_custom_call.1} parent=1 // pred_region
      %918 = dma.done [#allocation8], 32
    $region24: #{tpu_custom_call.1} parent=1 // pred_fallthru
      _
    %919 = vsyncpa [#allocation7], 1
    %920 = vsyncpa [#allocation8], 1

</llo_original>
